<compile_context>
chip_gen: v7x
topology: tpu7x:2x2x1
jax: 0.10.0
libtpu: 0.0.40
codegen_flags: <defaults>
</compile_context>

<pallas_src>
import functools

import jax
import jax.numpy as jnp
from jax.experimental import pallas as pl
from jax.experimental.pallas import tpu as pltpu


_SUBLANE = 16              # bf16 sublane tile (also valid for f32)
_ASSUMED_TENSORCORES = 2   # v7x has 2 TCs/chip; extra steps are harmless on 1-TC chips


def _round_up(x, m):
    return ((x + m - 1) // m) * m


def _tpu_vmem_capacity_bytes():
    try:
        cap = int(pltpu.get_tpu_info().vmem_capacity_bytes)
        if cap > 0:
            return cap
    except Exception:
        pass
    return 64 << 20  # conservative default: v7x per-TensorCore VMEM


def _sine_layer_kernel(x_ref, w_ref, b_ref, o_ref, *, mxu_dtype):
    # x_ref: (tm, in_pad) f32 or bf16 ; w_ref: (in_pad, out_pad) bf16 pre-scaled by 0.5*omega_0
    # b_ref: (1, out_pad) f32 pre-scaled by 0.5*omega_0 ; o_ref: (tm, out_pad) f32 or bf16
    x = x_ref[...].astype(mxu_dtype)                      # MXU bf16 path, f32 accumulate
    z = jnp.dot(x, w_ref[...], preferred_element_type=jnp.float32)
    z = z + b_ref[...]                                    # f32 epilogue (v5e-safe)
    # sigmoid(omega_0 * linear(x)) == 0.5*tanh(0.5*omega_0*linear(x)) + 0.5;
    # the 0.5*omega_0 factor is folded into w/b, so this is one EUP tanh.
    o_ref[...] = (0.5 * jnp.tanh(z) + 0.5).astype(o_ref.dtype)


def _choose_tm(n, in_pad, out_pad, x_bytes, out_bytes, *, budget_bytes, max_tm=2048):
    """Largest row tile that fits the VMEM budget, with >=2 pipelined steps per TC."""
    fixed = in_pad * out_pad * 2 + out_pad * 4            # single-buffered bf16 W + f32 b
    per_row = 2 * (in_pad * x_bytes + out_pad * out_bytes)  # double-buffered x/out tiles
    tm = max_tm
    while tm > _SUBLANE and fixed + tm * per_row > budget_bytes:
        tm //= 2
    min_steps = 2 * _ASSUMED_TENSORCORES
    if n >= min_steps * _SUBLANE:
        tm = min(tm, _round_up(pl.cdiv(n, min_steps), _SUBLANE))
    return max(_SUBLANE, min(tm, _round_up(n, _SUBLANE)))


def prepare_sine_layer_params(weight_t, bias, omega_0, *, mxu_dtype=jnp.bfloat16):
    """One-time parameter transform: pad feature dims to 128 and fold 0.5*omega_0.

    weight_t: (in_f, out_f) f32 (already transposed from PyTorch's (out, in)).
    bias:     (out_f,) f32.
    Returns (w_packed[bf16, (in_pad,out_pad)], b_packed[f32, (1,out_pad)]).
    """
    in_f, out_f = weight_t.shape
    in_pad = _round_up(in_f, 128)
    out_pad = _round_up(out_f, 128)
    scale = 0.5 * float(omega_0)
    w = jnp.zeros((in_pad, out_pad), jnp.float32).at[:in_f, :out_f].set(weight_t * scale)
    b = jnp.zeros((1, out_pad), jnp.float32).at[0, :out_f].set(bias * scale)
    return w.astype(mxu_dtype), b


def sine_layer_forward(x, w_packed, b_packed, out_features, *, tm=None,
                       out_dtype=jnp.bfloat16, keep_padded_output=False,
                       mxu_dtype=jnp.bfloat16):
    """x: (N, in_f) f32 or bf16; w_packed/b_packed from prepare_sine_layer_params.

    out_dtype: bf16 for chained hidden layers (halves HBM writeback), f32 for the
    network's final layer.
    """
    n, in_f = x.shape
    in_pad, out_pad = w_packed.shape

    # Lane-dense feature padding of the activation; a no-op when in_f is already a
    # multiple of 128.
    # TODO(synk): prefer fixing the model width to a 128-multiple (or padding once
    #             outside the hot path) so this per-call pad never materializes.
    if in_f != in_pad:
        x = jnp.pad(x, ((0, 0), (0, in_pad - in_f)))

    vmem_cap = _tpu_vmem_capacity_bytes()
    if tm is None:
        tm = _choose_tm(n, in_pad, out_pad,
                        jnp.dtype(x.dtype).itemsize, jnp.dtype(out_dtype).itemsize,
                        budget_bytes=(vmem_cap * 3) // 8)      # ~37% of physical VMEM
    grid = (pl.cdiv(n, tm),)   # ragged last block: OOB reads garbage, OOB writes dropped
    vmem_limit = int(min((vmem_cap * 3) // 4, 100 << 20))       # headroom for Mosaic scratch

    kernel = functools.partial(_sine_layer_kernel, mxu_dtype=mxu_dtype)

    def run(single_buffer_resident):
        if single_buffer_resident:
            # Constant index_map -> no need to double-buffer the resident weight/bias.
            w_spec = pl.BlockSpec((in_pad, out_pad), lambda i: (0, 0),
                                  pipeline_mode=pl.Buffered(1))
            b_spec = pl.BlockSpec((1, out_pad), lambda i: (0, 0),
                                  pipeline_mode=pl.Buffered(1))
        else:
            w_spec = pl.BlockSpec((in_pad, out_pad), lambda i: (0, 0))
            b_spec = pl.BlockSpec((1, out_pad), lambda i: (0, 0))
        return pl.pallas_call(
            kernel,
            out_shape=jax.ShapeDtypeStruct((n, out_pad), out_dtype),
            grid_spec=pltpu.PrefetchScalarGridSpec(
                num_scalar_prefetch=0,
                grid=grid,
                in_specs=[
                    pl.BlockSpec((tm, in_pad), lambda i: (i, 0)),   # x row tile
                    w_spec,                                         # resident bf16 weight
                    b_spec,                                         # resident f32 bias
                ],
                out_specs=pl.BlockSpec((tm, out_pad), lambda i: (i, 0)),
            ),
            compiler_params=pltpu.CompilerParams(
                dimension_semantics=("parallel",),
                vmem_limit_bytes=vmem_limit,
            ),
        )(x, w_packed, b_packed)

    try:
        y = run(True)
    except Exception:
        # TODO(synk): remove fallback once Buffered(1) resident-weight mode is verified
        #             on all deployed Pallas/Mosaic versions.
        y = run(False)

    if (not keep_padded_output) and out_pad != out_features:
        # Lane slice materializes a copy; prefer keep_padded_output=True when the next
        # SineLayer consumes the 128-padded layout directly.
        y = y[:, :out_features]
    return y


def init_sine_layer_params(key, in_features, out_features, *,
                           is_first=False, omega_0=30.0):
    """Matches SineLayer.init_weights (uniform bounds); PyTorch weight is (out, in),
    stored here pre-transposed as (in, out)."""
    kw, kb = jax.random.split(key)
    if is_first:
        bound = 1.0 / in_features
    else:
        bound = float(jnp.sqrt(6.0 / in_features)) / omega_0
    weight_t = jax.random.uniform(kw, (in_features, out_features),
                                  dtype=jnp.float32, minval=-bound, maxval=bound)
    # Bias keeps nn.Linear's default init: U(-1/sqrt(in), 1/sqrt(in)).
    b_bound = 1.0 / float(jnp.sqrt(in_features))
    bias = jax.random.uniform(kb, (out_features,), dtype=jnp.float32,
                              minval=-b_bound, maxval=b_bound)
    return weight_t, bias


if __name__ == "__main__":
    key = jax.random.PRNGKey(0)
    k_x, k_p, k_x2, k_p2 = jax.random.split(key, 4)
    omega_0 = 30.0

    # Hidden-layer style call: lane-dense 128-wide features, bf16 output, ragged row
    # count (exercises the no-row-pad / OOB-last-block path).
    N, in_features, out_features = 200, 128, 128
    x = jax.random.uniform(k_x, (N, in_features), dtype=jnp.float32,
                           minval=-1.0, maxval=1.0)
    weight_t, bias = init_sine_layer_params(
        k_p, in_features, out_features, is_first=True, omega_0=omega_0)
    w_packed, b_packed = prepare_sine_layer_params(weight_t, bias, omega_0)

    y = sine_layer_forward(x, w_packed, b_packed, out_features,
                           out_dtype=jnp.bfloat16)
    jax.block_until_ready(y)

    y_ref = jax.nn.sigmoid(omega_0 * (x @ weight_t + bias[None, :]))
    assert y.shape == (N, out_features) and y.dtype == jnp.bfloat16
    err = float(jnp.max(jnp.abs(y.astype(jnp.float32) - y_ref)))
    assert err < 2e-2, err

    # Final-layer style call: non-128-multiple widths (feature pad + lane slice paths),
    # f32 output.
    N2, in2, out2 = 100, 64, 96
    x2 = jax.random.uniform(k_x2, (N2, in2), dtype=jnp.float32,
                            minval=-1.0, maxval=1.0)
    w2_t, b2 = init_sine_layer_params(k_p2, in2, out2, is_first=False, omega_0=omega_0)
    w2_p, b2_p = prepare_sine_layer_params(w2_t, b2, omega_0)

    y2 = sine_layer_forward(x2, w2_p, b2_p, out2, out_dtype=jnp.float32)
    jax.block_until_ready(y2)

    y2_ref = jax.nn.sigmoid(omega_0 * (x2 @ w2_t + b2[None, :]))
    assert y2.shape == (N2, out2) and y2.dtype == jnp.float32
    err2 = float(jnp.max(jnp.abs(y2 - y2_ref)))
    assert err2 < 2e-2, err2

    print("KERNEL_OK")
</pallas_src>

<mosaic_0001>
module attributes {stable_mosaic.version = 11 : i64} {
  func.func @_sine_layer_kernel(%arg0: i32, %arg1: memref<64x128xf32, #tpu.memory_space<vmem>>, %arg2: memref<128x128xbf16, #tpu.memory_space<vmem>>, %arg3: memref<1x128xf32, #tpu.memory_space<vmem>>, %arg4: memref<64x128xbf16, #tpu.memory_space<vmem>>) attributes {dimension_semantics = [#tpu.dimension_semantics<parallel>], iteration_bounds = array<i64: 4>, scalar_prefetch = 0 : i64, scratch_operands = 0 : i64, tpu.core_type = #tpu.core_type<tc>, window_params = [{transform_indices = @transform_0, window_bounds = array<i64: 64, 128>}, {pipeline_mode = #tpu.pipeline_mode<synchronous>, transform_indices = @transform_1, window_bounds = array<i64: 128, 128>}, {pipeline_mode = #tpu.pipeline_mode<synchronous>, transform_indices = @transform_2, window_bounds = array<i64: 1, 128>}, {transform_indices = @transform_3, window_bounds = array<i64: 64, 128>}]} {
    %c0 = arith.constant 0 : index
    %c0_0 = arith.constant 0 : index
    %0 = vector.load %arg1[%c0, %c0_0] : memref<64x128xf32, #tpu.memory_space<vmem>>, vector<64x128xf32>
    %1 = arith.truncf %0 : vector<64x128xf32> to vector<64x128xbf16>
    %c0_1 = arith.constant 0 : index
    %c0_2 = arith.constant 0 : index
    %2 = vector.load %arg2[%c0_1, %c0_2] : memref<128x128xbf16, #tpu.memory_space<vmem>>, vector<128x128xbf16>
    %cst = arith.constant dense<0.000000e+00> : vector<64x128xf32>
    %3 = tpu.matmul %1, %2, %cst {dimension_numbers = #tpu.dot_dimension_numbers<[1], [0], [0], [1], [0, 0, 1, 1], [], []>} : vector<64x128xbf16>, vector<128x128xbf16>, vector<64x128xf32> -> vector<64x128xf32>
    %c0_3 = arith.constant 0 : index
    %c0_4 = arith.constant 0 : index
    %4 = vector.load %arg3[%c0_3, %c0_4] : memref<1x128xf32, #tpu.memory_space<vmem>>, vector<1x128xf32>
    %5 = vector.broadcast %4 : vector<1x128xf32> to vector<64x128xf32>
    %6 = arith.addf %3, %5 : vector<64x128xf32>
    %7 = math.tanh %6 : vector<64x128xf32>
    %cst_5 = arith.constant 5.000000e-01 : f32
    %8 = vector.broadcast %cst_5 : f32 to vector<64x128xf32>
    %9 = arith.mulf %8, %7 : vector<64x128xf32>
    %cst_6 = arith.constant 5.000000e-01 : f32
    %10 = vector.broadcast %cst_6 : f32 to vector<64x128xf32>
    %11 = arith.addf %9, %10 : vector<64x128xf32>
    %12 = arith.truncf %11 : vector<64x128xf32> to vector<64x128xbf16>
    %c0_7 = arith.constant 0 : index
    %c0_8 = arith.constant 0 : index
    %13 = vector.load %arg4[%c0_7, %c0_8] : memref<64x128xbf16, #tpu.memory_space<vmem>>, vector<64x128xbf16>
    tpu.vector_store %arg4[%c0_7, %c0_8], %12 {strides = array<i32>} : memref<64x128xbf16, #tpu.memory_space<vmem>>, vector<64x128xbf16>,
    return
  }
  func.func @transform_0(%arg0: i32) -> (i32, i32) {
    %c0_i32 = arith.constant 0 : i32
    %c0_i32_0 = arith.constant 0 : i32
    return %arg0, %c0_i32 : i32, i32
  }
  func.func @transform_1(%arg0: i32) -> (i32, i32) {
    %c0_i32 = arith.constant 0 : i32
    %c0_i32_0 = arith.constant 0 : i32
    %c0_i32_1 = arith.constant 0 : i32
    return %c0_i32, %c0_i32_0 : i32, i32
  }
  func.func @transform_2(%arg0: i32) -> (i32, i32) {
    %c0_i32 = arith.constant 0 : i32
    %c0_i32_0 = arith.constant 0 : i32
    %c0_i32_1 = arith.constant 0 : i32
    return %c0_i32, %c0_i32_0 : i32, i32
  }
  func.func @transform_3(%arg0: i32) -> (i32, i32) {
    %c0_i32 = arith.constant 0 : i32
    %c0_i32_0 = arith.constant 0 : i32
    return %arg0, %c0_i32 : i32, i32
  }
}

module attributes {stable_mosaic.version = 11 : i64} {
  func.func @_sine_layer_kernel(%arg0: i32, %arg1: memref<64x128xf32, #tpu.memory_space<vmem>>, %arg2: memref<128x128xbf16, #tpu.memory_space<vmem>>, %arg3: memref<1x128xf32, #tpu.memory_space<vmem>>, %arg4: memref<64x128xbf16, #tpu.memory_space<vmem>>) attributes {dimension_semantics = [#tpu.dimension_semantics<parallel>], iteration_bounds = array<i64: 4>, scalar_prefetch = 0 : i64, scratch_operands = 0 : i64, tpu.core_type = #tpu.core_type<tc>, window_params = [{transform_indices = @transform_0, window_bounds = array<i64: 64, 128>}, {pipeline_mode = #tpu.pipeline_mode<synchronous>, transform_indices = @transform_1, window_bounds = array<i64: 128, 128>}, {pipeline_mode = #tpu.pipeline_mode<synchronous>, transform_indices = @transform_2, window_bounds = array<i64: 1, 128>}, {transform_indices = @transform_3, window_bounds = array<i64: 64, 128>}]} {
    %c0 = arith.constant 0 : index
    %c0_0 = arith.constant 0 : index
    %0 = vector.load %arg1[%c0, %c0_0] : memref<64x128xf32, #tpu.memory_space<vmem>>, vector<64x128xf32>
    %1 = arith.truncf %0 : vector<64x128xf32> to vector<64x128xbf16>
    %c0_1 = arith.constant 0 : index
    %c0_2 = arith.constant 0 : index
    %2 = vector.load %arg2[%c0_1, %c0_2] : memref<128x128xbf16, #tpu.memory_space<vmem>>, vector<128x128xbf16>
    %cst = arith.constant dense<0.000000e+00> : vector<64x128xf32>
    %3 = tpu.matmul %1, %2, %cst {dimension_numbers = #tpu.dot_dimension_numbers<[1], [0], [0], [1], [0, 0, 1, 1], [], []>} : vector<64x128xbf16>, vector<128x128xbf16>, vector<64x128xf32> -> vector<64x128xf32>
    %c0_3 = arith.constant 0 : index
    %c0_4 = arith.constant 0 : index
    %4 = vector.load %arg3[%c0_3, %c0_4] : memref<1x128xf32, #tpu.memory_space<vmem>>, vector<1x128xf32>
    %5 = vector.broadcast %4 : vector<1x128xf32> to vector<64x128xf32>
    %6 = arith.addf %3, %5 : vector<64x128xf32>
    %7 = math.tanh %6 : vector<64x128xf32>
    %cst_5 = arith.constant 5.000000e-01 : f32
    %8 = vector.broadcast %cst_5 : f32 to vector<64x128xf32>
    %9 = arith.mulf %8, %7 : vector<64x128xf32>
    %cst_6 = arith.constant 5.000000e-01 : f32
    %10 = vector.broadcast %cst_6 : f32 to vector<64x128xf32>
    %11 = arith.addf %9, %10 : vector<64x128xf32>
    %12 = arith.truncf %11 : vector<64x128xf32> to vector<64x128xbf16>
    %c0_7 = arith.constant 0 : index
    %c0_8 = arith.constant 0 : index
    %13 = vector.load %arg4[%c0_7, %c0_8] : memref<64x128xbf16, #tpu.memory_space<vmem>>, vector<64x128xbf16>
    tpu.vector_store %arg4[%c0_7, %c0_8], %12 {strides = array<i32>} : memref<64x128xbf16, #tpu.memory_space<vmem>>, vector<64x128xbf16>,
    return
  }
  func.func @transform_0(%arg0: i32) -> (i32, i32) {
    %c0_i32 = arith.constant 0 : i32
    %c0_i32_0 = arith.constant 0 : i32
    return %arg0, %c0_i32 : i32, i32
  }
  func.func @transform_1(%arg0: i32) -> (i32, i32) {
    %c0_i32 = arith.constant 0 : i32
    %c0_i32_0 = arith.constant 0 : i32
    %c0_i32_1 = arith.constant 0 : i32
    return %c0_i32, %c0_i32_0 : i32, i32
  }
  func.func @transform_2(%arg0: i32) -> (i32, i32) {
    %c0_i32 = arith.constant 0 : i32
    %c0_i32_0 = arith.constant 0 : i32
    %c0_i32_1 = arith.constant 0 : i32
    return %c0_i32, %c0_i32_0 : i32, i32
  }
  func.func @transform_3(%arg0: i32) -> (i32, i32) {
    %c0_i32 = arith.constant 0 : i32
    %c0_i32_0 = arith.constant 0 : i32
    return %arg0, %c0_i32 : i32, i32
  }
}

</mosaic_0001>

<llo_original>
// kernel: tpu_custom_call.1
$region0: #{tpu_custom_call.1}
  #allocation0 [shape = 'u32[]', space=smem, size = 0x4, offset = 0x4, fixed_abs, tag = 'smem constant byte address 0x4 - core index']
  #allocation1 [shape = 'u32[144,128]{1,0:T(1,128)}', space=vmem, size = 0x12000, scoped, tag = 'internal scratch']
  %s0 = inlined_call_operand.hbm [shape: f32[200,128], index: 0, kind: input, shape index: {}]
  %s1 = inlined_call_operand.hbm [shape: bf16[128,128], index: 1, kind: input, shape index: {}]
  %s2 = inlined_call_operand.vmem [shape: f32[1,128], index: 2, kind: input, shape index: {}]
  %s3 = inlined_call_operand.hbm [shape: bf16[200,128], index: 3, kind: output, shape index: {}]
  %s4 = sld [smem:[#allocation0]]
  $region53: #{tpu_custom_call.1} parent=0
    _
  %s6 = ssub.s32 1, %s4
  %s7 = scalar_select 0, %s6, %s4
  $region1: #{tpu_custom_call.1} parent=0
    #allocation2 [shape = 'u8[65536]{0}', space=vmem, size = 0x10000, scoped, tag = 'input window, operand 0']
    #allocation3 [shape = 's32[2]{0}', space=sflag, size = 0x8, scoped, tag = 'scoped memory for tpu_custom_call.1']
    #allocation4 [shape = 's32[2]{0}', space=sflag, size = 0x8, scoped, tag = 'scoped memory for tpu_custom_call.1']
    #allocation5 [shape = 'u8[32768]{0}', space=vmem, size = 0x8000, scoped, tag = 'input window, operand 1, single buffered']
    #allocation6 [shape = 's32[1]{0}', space=sflag, size = 0x4, scoped, tag = 'scoped memory for tpu_custom_call.1']
    #allocation7 [shape = 'u8[32768]{0}', space=vmem, size = 0x8000, scoped, tag = 'output window, operand 0']
    %8 = vsyncpa [#allocation3], 0
    %s9 = scalar_lea.sflag [#allocation3], 1
    %10 = vsyncpa %s9, 0
    %11 = vsyncpa [#allocation6], 0
    %12 = vsyncpa [#allocation4], 0
    %s13 = scalar_lea.sflag [#allocation4], 1
    %14 = vsyncpa %s13, 0
    loop: start=0, step=1, limit=6
    $region2: #{tpu_custom_call.1} parent=1 // loop_pre_header
      _
    $region3: #{tpu_custom_call.1} parent=1 // loop_header
      %s16 = sphi 0, %s20
      %p17 = scmp.ge.s32.totalorder %s16, 6
      %s26 = sphi 0, %s28
      %s29 = sphi 0, %s26
      %s30 = sphi 0, %s29
      %s46 = sphi 0, %s30
      %s50 = sphi 0, %s50
      %s52 = sphi 0, %s50
      %s53 = sphi 0, %s52
      %s67 = sphi 0, %s53
      %s71 = sphi 0, %s71
      %s73 = sphi 0, %s71
      %s74 = sphi 0, %s73
      %s88 = sphi 0, %s74
      %s94 = sphi 0, %s96
      %s97 = sphi 0, %s94
      %s98 = sphi 0, %s97
      %s114 = sphi 0, %s98
    $region4: #{tpu_custom_call.1} parent=1 // loop_header_branch
      %19 = sbr.rel (%p17) target = $region8
    $region5: #{tpu_custom_call.1} parent=1 // loop_body
      %s21 = ssub.s32 %s16, 1
      %s22 = ssub.s32 %s16, 2
      %s23 = sadd.s32 %s16, 1
      %s24 = ssub.s32 %s16, %s23
      %p25 = scmp.eq.s32.totalorder %s24, 0
      %s27 = sadd.s32 %s26, 1
      %s28 = scalar_select %p25, %s26, %s27
      %p31 = pneg %p25
      %p32 = scmp.eq.s32.totalorder %s16, 3
      %p33 = por %p31, %p32
      %p34 = scmp.ne.s32.totalorder %s26, %s29
      %p35 = scmp.eq.s32.totalorder %s16, 0
      %p36 = por %p34, %p35
      %p37 = scmp.ne.s32.totalorder %s26, %s29
      %p38 = scmp.eq.s32.totalorder %s21, 3
      %p39 = por %p37, %p38
      %p40 = scmp.ne.s32.totalorder %s29, %s30
      %p41 = scmp.eq.s32.totalorder %s21, 0
      %p42 = por %p40, %p41
      %p43 = scmp.ne.s32.totalorder %s29, %s30
      %p44 = scmp.eq.s32.totalorder %s22, 3
      %p45 = por %p43, %p44
      %p47 = scmp.ne.s32.totalorder %s30, %s46
      %p48 = scmp.eq.s32.totalorder %s22, 0
      %p49 = por %p47, %p48
      %s51 = sadd.s32 %s50, 1
      %p54 = scmp.eq.s32.totalorder %s16, 3
      %p55 = scmp.ne.s32.totalorder %s50, %s52
      %p56 = scmp.eq.s32.totalorder %s16, 0
      %p57 = por %p55, %p56
      %p58 = scmp.ne.s32.totalorder %s50, %s52
      %p59 = scmp.eq.s32.totalorder %s21, 3
      %p60 = por %p58, %p59
      %p61 = scmp.ne.s32.totalorder %s52, %s53
      %p62 = scmp.eq.s32.totalorder %s21, 0
      %p63 = por %p61, %p62
      %p64 = scmp.ne.s32.totalorder %s52, %s53
      %p65 = scmp.eq.s32.totalorder %s22, 3
      %p66 = por %p64, %p65
      %p68 = scmp.ne.s32.totalorder %s53, %s67
      %p69 = scmp.eq.s32.totalorder %s22, 0
      %p70 = por %p68, %p69
      %s72 = sadd.s32 %s71, 1
      %p75 = scmp.eq.s32.totalorder %s16, 3
      %p76 = scmp.ne.s32.totalorder %s71, %s73
      %p77 = scmp.eq.s32.totalorder %s16, 0
      %p78 = por %p76, %p77
      %p79 = scmp.ne.s32.totalorder %s71, %s73
      %p80 = scmp.eq.s32.totalorder %s21, 3
      %p81 = por %p79, %p80
      %p82 = scmp.ne.s32.totalorder %s73, %s74
      %p83 = scmp.eq.s32.totalorder %s21, 0
      %p84 = por %p82, %p83
      %p85 = scmp.ne.s32.totalorder %s73, %s74
      %p86 = scmp.eq.s32.totalorder %s22, 3
      %p87 = por %p85, %p86
      %p89 = scmp.ne.s32.totalorder %s74, %s88
      %p90 = scmp.eq.s32.totalorder %s22, 0
      %p91 = por %p89, %p90
      %s92 = ssub.s32 %s16, %s23
      %p93 = scmp.eq.s32.totalorder %s92, 0
      %s95 = sadd.s32 %s94, 1
      %s96 = scalar_select %p93, %s94, %s95
      %p99 = pneg %p93
      %p100 = scmp.eq.s32.totalorder %s16, 3
      %p101 = por %p99, %p100
      %p102 = scmp.ne.s32.totalorder %s94, %s97
      %p103 = scmp.eq.s32.totalorder %s16, 0
      %p104 = por %p102, %p103
      %p105 = scmp.ne.s32.totalorder %s94, %s97
      %p106 = scmp.eq.s32.totalorder %s21, 3
      %p107 = por %p105, %p106
      %p108 = scmp.ne.s32.totalorder %s97, %s98
      %p109 = scmp.eq.s32.totalorder %s21, 0
      %p110 = por %p108, %p109
      %p111 = scmp.ne.s32.totalorder %s97, %s98
      %p112 = scmp.eq.s32.totalorder %s22, 3
      %p113 = por %p111, %p112
      %p115 = scmp.ne.s32.totalorder %s98, %s114
      %p116 = scmp.eq.s32.totalorder %s22, 0
      %p117 = por %p115, %p116
      %p118 = scmp.le.s32.totalorder 1, %s16
      %p119 = scmp.lt.s32.totalorder %s16, 5
      %p120 = pnand %p118, %p119
      %p121 = pneg %p120
      // Predicated region
      $region9: #{tpu_custom_call.1} parent=5 // pred_check
        _
      $region10: #{tpu_custom_call.1} parent=5 // pred_check_branch
        %123 = sbr.rel (%p120) target = $region12
      $region11: #{tpu_custom_call.1} parent=5 // pred_region
        %s124 = ssub.s32 %s16, 1
        // Predicated region
        $region13: #{tpu_custom_call.1} parent=11 // pred_check
          %p125 = pneg %p63
        $region14: #{tpu_custom_call.1} parent=11 // pred_check_branch
          %127 = sbr.rel (%p125) target = $region16
        $region15: #{tpu_custom_call.1} parent=11 // pred_region
          %s129 = ssub.s32 1024, 1024
          %130 = vsyncadd [#allocation6], %s129
          %s131 = sshll.u32 [#allocation5], 4
          %s132 = int_to_ptr.vmem [resolvable:$true] %s131
          %137 = dma.hbm_to_vmem [thread:$0]  %s1, 1024, %s132, [#allocation6], 64, 64, 4
        $region16: #{tpu_custom_call.1} parent=11 // pred_fallthru
          _
        // Predicated region
        $region17: #{tpu_custom_call.1} parent=11 // pred_check
          %p138 = pneg %p84
        $region18: #{tpu_custom_call.1} parent=11 // pred_check_branch
          %140 = sbr.rel (%p138) target = $region20
        $region19: #{tpu_custom_call.1} parent=11 // pred_region
          _
        $region20: #{tpu_custom_call.1} parent=11 // pred_fallthru
          _
      $region12: #{tpu_custom_call.1} parent=5 // pred_fallthru
        _
      %p141 = scmp.lt.s32.totalorder %s16, 4
      // Predicated region
      $region21: #{tpu_custom_call.1} parent=5 // pred_check
        %p142 = pneg %p141
      $region22: #{tpu_custom_call.1} parent=5 // pred_check_branch
        %144 = sbr.rel (%p142) target = $region24
      $region23: #{tpu_custom_call.1} parent=5 // pred_region
        // Predicated region
        $region25: #{tpu_custom_call.1} parent=23 // pred_check
          %p145 = pneg %p36
        $region26: #{tpu_custom_call.1} parent=23 // pred_check_branch
          %147 = sbr.rel (%p145) target = $region28
        $region27: #{tpu_custom_call.1} parent=23 // pred_region
          %s148 = sand.u32 %s26, 1
          %s149 = scalar_lea.sflag [#allocation3], %s148
          %s150 = sand.u32 %s26, 1
          %s151 = smul.addr %s150, 64
          %s152 = scalar_lea.vmem [#allocation2], %s151
          %s153 = smul.u32 8, %s16
          %s154 = ssub.s32 25, %s153
          %p155 = scmp.lt.s32.totalorder %s154, 8
          %s156 = scalar_select %p155, %s154, 8
          %s157 = smul.u32 128, %s156
          %s159 = ssub.s32 1024, %s157
          %160 = vsyncadd %s149, %s159
          %p161 = scmp.ne.s32.totalorder 0, %s157
          %s162 = smul.addr %s153, 128
          %s163 = scalar_lea.hbm %s0, %s162
          %s164 = smul.u32 8, %s156
          %s165 = sshll.u32 %s152, 4
          %s166 = int_to_ptr.vmem [resolvable:$true] %s165
          %s167 = sshll.u32 %s164, 4
          %171 = dma.hbm_to_vmem [thread:$0]  (%p161), %s163, %s167, %s166, %s149, 128, 128, 8
        $region28: #{tpu_custom_call.1} parent=23 // pred_fallthru
          _
      $region24: #{tpu_custom_call.1} parent=5 // pred_fallthru
        _
      %p172 = scmp.le.s32.totalorder 1, %s16
      %p173 = scmp.lt.s32.totalorder %s16, 5
      %p174 = pnand %p172, %p173
      %p175 = pneg %p174
      // Predicated region
      $region29: #{tpu_custom_call.1} parent=5 // pred_check
        _
      $region30: #{tpu_custom_call.1} parent=5 // pred_check_branch
        %177 = sbr.rel (%p174) target = $region32
      $region31: #{tpu_custom_call.1} parent=5 // pred_region
        %s178 = ssub.s32 %s16, 1
        %s179 = sand.u32 %s29, 1
        %s180 = scalar_lea.sflag [#allocation3], %s179
        %s181 = sand.u32 %s29, 1
        %s182 = smul.addr %s181, 64
        %s183 = scalar_lea.vmem [#allocation2], %s182
        // Predicated region
        $region33: #{tpu_custom_call.1} parent=31 // pred_check
          %p184 = pneg %p42
        $region34: #{tpu_custom_call.1} parent=31 // pred_check_branch
          %186 = sbr.rel (%p184) target = $region36
        $region35: #{tpu_custom_call.1} parent=31 // pred_region
          %187 = dma.done %s180, 1024
        $region36: #{tpu_custom_call.1} parent=31 // pred_fallthru
          _
        // Predicated region
        $region37: #{tpu_custom_call.1} parent=31 // pred_check
          %p188 = pneg %p63
        $region38: #{tpu_custom_call.1} parent=31 // pred_check_branch
          %190 = sbr.rel (%p188) target = $region40
        $region39: #{tpu_custom_call.1} parent=31 // pred_region
          %191 = dma.done [#allocation6], 1024
        $region40: #{tpu_custom_call.1} parent=31 // pred_fallthru
          _
        %s192 = sand.u32 %s29, 1
        %s193 = scalar_lea.sflag [#allocation3], %s192
        %s194 = sand.u32 %s29, 1
        %s195 = smul.addr %s194, 64
        %s196 = scalar_lea.vmem [#allocation2], %s195
        %p197 = pneg %p42
        %p198 = pneg %p39
        %p199 = pneg %p63
        %p200 = pneg %p60
        %p201 = pneg %p84
        %p202 = pneg %p81
        %p203 = pneg %p110
        %p204 = pneg %p107
        %s205 = sand.u32 %s97, 1
        %s206 = scalar_lea.sflag [#allocation4], %s205
        %s207 = sand.u32 %s97, 1
        %s208 = smul.addr %s207, 32
        %s209 = scalar_lea.vmem [#allocation7], %s208
        %s210 = smul.u32 8, %s21
        %s211 = ssub.s32 25, %s210
        %p212 = scmp.lt.s32.totalorder %s211, 8
        %s213 = scalar_select %p212, %s211, 8
        %s214 = smul.u32 128, %s213
        %s215 = smul.u32 8, %s21
        %s216 = ssub.s32 25, %s215
        %p217 = scmp.lt.s32.totalorder %s216, 8
        %s218 = scalar_select %p217, %s216, 8
        %s219 = smul.u32 64, %s218
        %v221 = vld [vmem:[%s183] sm:$0xff]
        %v222 = vld [vmem:[%s183 + $0x8] sm:$0xff]
        %v223 = vld [vmem:[%s183 + $0x10] sm:$0xff]
        %v224 = vld [vmem:[%s183 + $0x18] sm:$0xff]
        %v225 = vld [vmem:[%s183 + $0x20] sm:$0xff]
        %v226 = vld [vmem:[%s183 + $0x28] sm:$0xff]
        %v227 = vld [vmem:[%s183 + $0x30] sm:$0xff]
        %v228 = vld [vmem:[%s183 + $0x38] sm:$0xff]
        %v229 = vpack.c.bf16 %v222, %v221
        %v230 = vpack.c.bf16 %v224, %v223
        %v231 = vpack.c.bf16 %v226, %v225
        %v232 = vpack.c.bf16 %v228, %v227
        %v233 = vld [vmem:[#allocation5] sm:$0xf]
        %v234 = vld [vmem:[#allocation5 + $0x4] sm:$0xf]
        %v235 = vld [vmem:[#allocation5 + $0x8] sm:$0xf]
        %v236 = vld [vmem:[#allocation5 + $0xc] sm:$0xf]
        %v237 = vld [vmem:[#allocation5 + $0x10] sm:$0xf]
        %v238 = vld [vmem:[#allocation5 + $0x14] sm:$0xf]
        %v239 = vld [vmem:[#allocation5 + $0x18] sm:$0xf]
        %v240 = vld [vmem:[#allocation5 + $0x1c] sm:$0xf]
        %v241 = vld [vmem:[#allocation5 + $0x20] sm:$0xf]
        %v242 = vld [vmem:[#allocation5 + $0x24] sm:$0xf]
        %v243 = vld [vmem:[#allocation5 + $0x28] sm:$0xf]
        %v244 = vld [vmem:[#allocation5 + $0x2c] sm:$0xf]
        %v245 = vld [vmem:[#allocation5 + $0x30] sm:$0xf]
        %v246 = vld [vmem:[#allocation5 + $0x34] sm:$0xf]
        %v247 = vld [vmem:[#allocation5 + $0x38] sm:$0xf]
        %v248 = vld [vmem:[#allocation5 + $0x3c] sm:$0xf]
        %v249 = vld [vmem:[%s2] sm:$0x1]
        %v251 = vlaneseq
        %v252 = vshrl.u32 %v251, 7
        %v253 = vsub.s32 0, %v252
        %v254 = vrot.slane %v249, %v253
        %v272 = vunpack.c.l.b16 %v233
        %v273 = vunpack.c.l.b16 %v234
        %v274 = vunpack.c.l.b16 %v235
        %v275 = vunpack.c.l.b16 %v236
        %v276 = vunpack.c.l.b16 %v237
        %v277 = vunpack.c.l.b16 %v238
        %v278 = vunpack.c.l.b16 %v239
        %v279 = vunpack.c.l.b16 %v240
        %v280 = vunpack.c.l.b16 %v241
        %v281 = vunpack.c.l.b16 %v242
        %v282 = vunpack.c.l.b16 %v243
        %v283 = vunpack.c.l.b16 %v244
        %v284 = vunpack.c.l.b16 %v245
        %v285 = vunpack.c.l.b16 %v246
        %v286 = vunpack.c.l.b16 %v247
        %v287 = vunpack.c.l.b16 %v248
        %v288 = vpack.c.b16 %v273, %v272
        %v289 = vpack.c.b16 %v275, %v274
        %v290 = vpack.c.b16 %v277, %v276
        %v291 = vpack.c.b16 %v279, %v278
        %v292 = vpack.c.b16 %v281, %v280
        %v293 = vpack.c.b16 %v283, %v282
        %v294 = vpack.c.b16 %v285, %v284
        %v295 = vpack.c.b16 %v287, %v286
        %304 = vmatprep.subr.bf16.mxu0 0
        %305 = vmatpush1.bf16.msra.mxu0 %v288
        %306 = vmatprep.subr.bf16.mxu0 0
        %307 = vmatpush1.bf16.msra.mxu0 %v289
        %308 = vmatprep.subr.bf16.mxu0 0
        %309 = vmatpush1.bf16.msra.mxu0 %v290
        %310 = vmatprep.subr.bf16.mxu0 0
        %311 = vmatpush1.bf16.msra.mxu0 %v291
        %312 = vmatprep.subr.bf16.mxu0 0
        %313 = vmatpush1.bf16.msra.mxu0 %v292
        %314 = vmatprep.subr.bf16.mxu0 0
        %315 = vmatpush1.bf16.msra.mxu0 %v293
        %316 = vmatprep.subr.bf16.mxu0 0
        %317 = vmatpush1.bf16.msra.mxu0 %v294
        %318 = vmatprep.subr.bf16.mxu0 0
        %319 = vmatpush1.bf16.msra.mxu0 %v295
        %320 = vmatprep.subr.bf16.mxu0 0
        %321 = vmatpush1.bf16.msra.mxu0 0
        %322 = vmatprep.subr.bf16.mxu0 0
        %323 = vmatpush1.bf16.msra.mxu0 0
        %324 = vmatprep.subr.bf16.mxu0 0
        %325 = vmatpush1.bf16.msra.mxu0 0
        %326 = vmatprep.subr.bf16.mxu0 0
        %327 = vmatpush1.bf16.msra.mxu0 0
        %328 = vmatprep.subr.bf16.mxu0 0
        %329 = vmatpush1.bf16.msra.mxu0 0
        %330 = vmatprep.subr.bf16.mxu0 0
        %331 = vmatpush1.bf16.msra.mxu0 0
        %332 = vmatprep.subr.bf16.mxu0 0
        %333 = vmatpush1.bf16.msra.mxu0 0
        %334 = vmatprep.subr.bf16.mxu0 0
        %335 = vmatpush1.bf16.msra.mxu0 0
        %336 = vmatprep.mubr.bf16.mxu0 0
        %337 = vmatmul.mubr.bf16.gmra.mrb[0].mxu0 %v229
        %v338 = vpop.f32.mrb[0].mxu0
        %v339 = vadd.f32 %v254, %v338
        %v340 = vpop.f32.mrb[0].mxu0
        %v341 = vpop.f32.mrb[0].mxu0
        %v342 = vadd.f32 %v254, %v341
        %v343 = vpop.f32.mrb[0].mxu0
        %344 = vmatprep.mubr.bf16.mxu0 0
        %345 = vmatmul.mubr.bf16.gmra.mrb[0].mxu0 %v230
        %v346 = vpop.f32.mrb[0].mxu0
        %v347 = vadd.f32 %v254, %v346
        %v348 = vpop.f32.mrb[0].mxu0
        %v349 = vpop.f32.mrb[0].mxu0
        %v350 = vadd.f32 %v254, %v349
        %v351 = vpop.f32.mrb[0].mxu0
        %352 = vmatprep.mubr.bf16.mxu0 0
        %353 = vmatmul.mubr.bf16.gmra.mrb[0].mxu0 %v231
        %v354 = vpop.f32.mrb[0].mxu0
        %v355 = vadd.f32 %v254, %v354
        %v356 = vpop.f32.mrb[0].mxu0
        %v357 = vpop.f32.mrb[0].mxu0
        %v358 = vadd.f32 %v254, %v357
        %v359 = vpop.f32.mrb[0].mxu0
        %360 = vmatprep.mubr.bf16.mxu0 0
        %361 = vmatmul.mubr.bf16.gmra.mrb[0].mxu0 %v232
        %v362 = vpop.f32.mrb[0].mxu0
        %v363 = vadd.f32 %v254, %v362
        %v364 = vpop.f32.mrb[0].mxu0
        %v365 = vpop.f32.mrb[0].mxu0
        %v366 = vadd.f32 %v254, %v365
        %v367 = vpop.f32.mrb[0].mxu0
        %368 = vdwg.mxu0
        %v369 = vtanh.pop %v339
        %v370 = vtanh.pop %v342
        %v371 = vtanh.pop %v347
        %v372 = vtanh.pop %v350
        %v373 = vtanh.pop %v355
        %v374 = vtanh.pop %v358
        %v375 = vtanh.pop %v363
        %v376 = vtanh.pop %v366
        %v377 = vmul.f32 %v369, 0.5
        %v378 = vmul.f32 %v370, 0.5
        %v379 = vmul.f32 %v371, 0.5
        %v380 = vmul.f32 %v372, 0.5
        %v381 = vmul.f32 %v373, 0.5
        %v382 = vmul.f32 %v374, 0.5
        %v383 = vmul.f32 %v375, 0.5
        %v384 = vmul.f32 %v376, 0.5
        %v385 = vadd.f32 %v377, 0.5
        %v386 = vadd.f32 %v378, 0.5
        %v387 = vadd.f32 %v379, 0.5
        %v388 = vadd.f32 %v380, 0.5
        %v389 = vadd.f32 %v381, 0.5
        %v390 = vadd.f32 %v382, 0.5
        %v391 = vadd.f32 %v383, 0.5
        %v392 = vadd.f32 %v384, 0.5
        %v393 = vpack.c.bf16 %v386, %v385
        %v394 = vpack.c.bf16 %v388, %v387
        %v395 = vpack.c.bf16 %v390, %v389
        %v396 = vpack.c.bf16 %v392, %v391
        %v401 = vunpack.c.l.b16 %v393
        %v402 = vunpack.c.h.b16 %v393
        %v403 = vunpack.c.l.b16 %v394
        %v404 = vunpack.c.h.b16 %v394
        %v405 = vunpack.c.l.b16 %v395
        %v406 = vunpack.c.h.b16 %v395
        %v407 = vunpack.c.l.b16 %v396
        %v408 = vunpack.c.h.b16 %v396
        %v409 = vpack.c.b16 %v401, %v401
        %v410 = vpack.c.b16 %v402, %v402
        %v411 = vpack.c.b16 %v403, %v403
        %v412 = vpack.c.b16 %v404, %v404
        %v413 = vpack.c.b16 %v405, %v405
        %v414 = vpack.c.b16 %v406, %v406
        %v415 = vpack.c.b16 %v407, %v407
        %v416 = vpack.c.b16 %v408, %v408
        %425 = vst [vmem:[%s209] sm:$0xf] %v409
        %426 = vst [vmem:[%s209 + $0x4] sm:$0xf] %v410
        %427 = vst [vmem:[%s209 + $0x8] sm:$0xf] %v411
        %428 = vst [vmem:[%s209 + $0xc] sm:$0xf] %v412
        %429 = vst [vmem:[%s209 + $0x10] sm:$0xf] %v413
        %430 = vst [vmem:[%s209 + $0x14] sm:$0xf] %v414
        %431 = vst [vmem:[%s209 + $0x18] sm:$0xf] %v415
        %432 = vst [vmem:[%s209 + $0x1c] sm:$0xf] %v416
        %s433 = sand.u32 %s97, 1
        %s434 = scalar_lea.sflag [#allocation4], %s433
        %s435 = sand.u32 %s97, 1
        %s436 = smul.addr %s435, 32
        %s437 = scalar_lea.vmem [#allocation7], %s436
        // Predicated region
        $region41: #{tpu_custom_call.1} parent=31 // pred_check
          %p438 = pneg %p107
        $region42: #{tpu_custom_call.1} parent=31 // pred_check_branch
          %440 = sbr.rel (%p438) target = $region44
        $region43: #{tpu_custom_call.1} parent=31 // pred_region
          %s441 = smul.u32 8, %s21
          %s442 = ssub.s32 25, %s441
          %p443 = scmp.lt.s32.totalorder %s442, 8
          %s444 = scalar_select %p443, %s442, 8
          %s445 = smul.u32 64, %s444
          %s447 = ssub.s32 512, %s445
          %448 = vsyncadd %s434, %s447
          %p449 = scmp.ne.s32.totalorder 0, %s445
          %s450 = smul.addr %s441, 64
          %s451 = scalar_lea.hbm %s3, %s450
          %s452 = smul.u32 4, %s444
          %s453 = sshll.u32 %s437, 4
          %s454 = int_to_ptr.vmem [resolvable:$true] %s453
          %s455 = sshll.u32 %s452, 4
          %459 = dma.vmem_to_hbm [thread:$0]  (%p449), %s454, %s455, %s451, %s434, 64, 64, 4
        $region44: #{tpu_custom_call.1} parent=31 // pred_fallthru
          _
      $region32: #{tpu_custom_call.1} parent=5 // pred_fallthru
        _
      %p460 = scmp.le.s32.totalorder 2, %s16
      // Predicated region
      $region45: #{tpu_custom_call.1} parent=5 // pred_check
        %p461 = pneg %p460
      $region46: #{tpu_custom_call.1} parent=5 // pred_check_branch
        %463 = sbr.rel (%p461) target = $region48
      $region47: #{tpu_custom_call.1} parent=5 // pred_region
        %s464 = ssub.s32 %s16, 2
        // Predicated region
        $region49: #{tpu_custom_call.1} parent=47 // pred_check
          %p465 = pneg %p113
        $region50: #{tpu_custom_call.1} parent=47 // pred_check_branch
          %467 = sbr.rel (%p465) target = $region52
        $region51: #{tpu_custom_call.1} parent=47 // pred_region
          %s468 = sand.u32 %s98, 1
          %s469 = scalar_lea.sflag [#allocation4], %s468
          %s470 = sand.u32 %s98, 1
          %s471 = smul.addr %s470, 32
          %s472 = scalar_lea.vmem [#allocation7], %s471
          %473 = dma.done %s469, 512
        $region52: #{tpu_custom_call.1} parent=47 // pred_fallthru
          _
      $region48: #{tpu_custom_call.1} parent=5 // pred_fallthru
        _
    $region6: #{tpu_custom_call.1} parent=1 // loop_footer
      %s20 = sadd.s32 1, %s16
    $region7: #{tpu_custom_call.1} parent=1 // loop_footer_branch
      %15 = sbr.rel target = $region3
    $region8: #{tpu_custom_call.1} parent=1 // loop_exit
      _
    %474 = vsyncpa [#allocation3], 1
    %s475 = scalar_lea.sflag [#allocation3], 1
    %476 = vsyncpa %s475, 1
    %477 = vsyncpa [#allocation6], 1
    %478 = vsyncpa [#allocation4], 1
    %s479 = scalar_lea.sflag [#allocation4], 1
    %480 = vsyncpa %s479, 1

// kernel: tpu_custom_call.1
$region0: #{tpu_custom_call.1}
  #allocation0 [shape = 'u32[]', space=smem, size = 0x4, offset = 0x4, fixed_abs, tag = 'smem constant byte address 0x4 - core index']
  #allocation1 [shape = 'u32[144,128]{1,0:T(1,128)}', space=vmem, size = 0x12000, scoped, tag = 'internal scratch']
  %s0 = inlined_call_operand.hbm [shape: f32[200,128], index: 0, kind: input, shape index: {}]
  %s1 = inlined_call_operand.hbm [shape: bf16[128,128], index: 1, kind: input, shape index: {}]
  %s2 = inlined_call_operand.vmem [shape: f32[1,128], index: 2, kind: input, shape index: {}]
  %s3 = inlined_call_operand.hbm [shape: bf16[200,128], index: 3, kind: output, shape index: {}]
  %s4 = sld [smem:[#allocation0]]
  $region53: #{tpu_custom_call.1} parent=0
    _
  %s6 = ssub.s32 1, %s4
  %s7 = scalar_select 0, %s6, %s4
  $region1: #{tpu_custom_call.1} parent=0
    #allocation2 [shape = 'u8[65536]{0}', space=vmem, size = 0x10000, scoped, tag = 'input window, operand 0']
    #allocation3 [shape = 's32[2]{0}', space=sflag, size = 0x8, scoped, tag = 'scoped memory for tpu_custom_call.1']
    #allocation4 [shape = 's32[2]{0}', space=sflag, size = 0x8, scoped, tag = 'scoped memory for tpu_custom_call.1']
    #allocation5 [shape = 'u8[32768]{0}', space=vmem, size = 0x8000, scoped, tag = 'input window, operand 1, single buffered']
    #allocation6 [shape = 's32[1]{0}', space=sflag, size = 0x4, scoped, tag = 'scoped memory for tpu_custom_call.1']
    #allocation7 [shape = 'u8[32768]{0}', space=vmem, size = 0x8000, scoped, tag = 'output window, operand 0']
    %8 = vsyncpa [#allocation3], 0
    %s9 = scalar_lea.sflag [#allocation3], 1
    %10 = vsyncpa %s9, 0
    %11 = vsyncpa [#allocation6], 0
    %12 = vsyncpa [#allocation4], 0
    %s13 = scalar_lea.sflag [#allocation4], 1
    %14 = vsyncpa %s13, 0
    loop: start=0, step=1, limit=6
    $region2: #{tpu_custom_call.1} parent=1 // loop_pre_header
      _
    $region3: #{tpu_custom_call.1} parent=1 // loop_header
      %s16 = sphi 0, %s20
      %p17 = scmp.ge.s32.totalorder %s16, 6
      %s26 = sphi 0, %s28
      %s29 = sphi 0, %s26
      %s30 = sphi 0, %s29
      %s46 = sphi 0, %s30
      %s50 = sphi 0, %s50
      %s52 = sphi 0, %s50
      %s53 = sphi 0, %s52
      %s67 = sphi 0, %s53
      %s71 = sphi 0, %s71
      %s73 = sphi 0, %s71
      %s74 = sphi 0, %s73
      %s88 = sphi 0, %s74
      %s94 = sphi 0, %s96
      %s97 = sphi 0, %s94
      %s98 = sphi 0, %s97
      %s114 = sphi 0, %s98
    $region4: #{tpu_custom_call.1} parent=1 // loop_header_branch
      %19 = sbr.rel (%p17) target = $region8
    $region5: #{tpu_custom_call.1} parent=1 // loop_body
      %s21 = ssub.s32 %s16, 1
      %s22 = ssub.s32 %s16, 2
      %s23 = sadd.s32 %s16, 1
      %s24 = ssub.s32 %s16, %s23
      %p25 = scmp.eq.s32.totalorder %s24, 0
      %s27 = sadd.s32 %s26, 1
      %s28 = scalar_select %p25, %s26, %s27
      %p31 = pneg %p25
      %p32 = scmp.eq.s32.totalorder %s16, 3
      %p33 = por %p31, %p32
      %p34 = scmp.ne.s32.totalorder %s26, %s29
      %p35 = scmp.eq.s32.totalorder %s16, 0
      %p36 = por %p34, %p35
      %p37 = scmp.ne.s32.totalorder %s26, %s29
      %p38 = scmp.eq.s32.totalorder %s21, 3
      %p39 = por %p37, %p38
      %p40 = scmp.ne.s32.totalorder %s29, %s30
      %p41 = scmp.eq.s32.totalorder %s21, 0
      %p42 = por %p40, %p41
      %p43 = scmp.ne.s32.totalorder %s29, %s30
      %p44 = scmp.eq.s32.totalorder %s22, 3
      %p45 = por %p43, %p44
      %p47 = scmp.ne.s32.totalorder %s30, %s46
      %p48 = scmp.eq.s32.totalorder %s22, 0
      %p49 = por %p47, %p48
      %s51 = sadd.s32 %s50, 1
      %p54 = scmp.eq.s32.totalorder %s16, 3
      %p55 = scmp.ne.s32.totalorder %s50, %s52
      %p56 = scmp.eq.s32.totalorder %s16, 0
      %p57 = por %p55, %p56
      %p58 = scmp.ne.s32.totalorder %s50, %s52
      %p59 = scmp.eq.s32.totalorder %s21, 3
      %p60 = por %p58, %p59
      %p61 = scmp.ne.s32.totalorder %s52, %s53
      %p62 = scmp.eq.s32.totalorder %s21, 0
      %p63 = por %p61, %p62
      %p64 = scmp.ne.s32.totalorder %s52, %s53
      %p65 = scmp.eq.s32.totalorder %s22, 3
      %p66 = por %p64, %p65
      %p68 = scmp.ne.s32.totalorder %s53, %s67
      %p69 = scmp.eq.s32.totalorder %s22, 0
      %p70 = por %p68, %p69
      %s72 = sadd.s32 %s71, 1
      %p75 = scmp.eq.s32.totalorder %s16, 3
      %p76 = scmp.ne.s32.totalorder %s71, %s73
      %p77 = scmp.eq.s32.totalorder %s16, 0
      %p78 = por %p76, %p77
      %p79 = scmp.ne.s32.totalorder %s71, %s73
      %p80 = scmp.eq.s32.totalorder %s21, 3
      %p81 = por %p79, %p80
      %p82 = scmp.ne.s32.totalorder %s73, %s74
      %p83 = scmp.eq.s32.totalorder %s21, 0
      %p84 = por %p82, %p83
      %p85 = scmp.ne.s32.totalorder %s73, %s74
      %p86 = scmp.eq.s32.totalorder %s22, 3
      %p87 = por %p85, %p86
      %p89 = scmp.ne.s32.totalorder %s74, %s88
      %p90 = scmp.eq.s32.totalorder %s22, 0
      %p91 = por %p89, %p90
      %s92 = ssub.s32 %s16, %s23
      %p93 = scmp.eq.s32.totalorder %s92, 0
      %s95 = sadd.s32 %s94, 1
      %s96 = scalar_select %p93, %s94, %s95
      %p99 = pneg %p93
      %p100 = scmp.eq.s32.totalorder %s16, 3
      %p101 = por %p99, %p100
      %p102 = scmp.ne.s32.totalorder %s94, %s97
      %p103 = scmp.eq.s32.totalorder %s16, 0
      %p104 = por %p102, %p103
      %p105 = scmp.ne.s32.totalorder %s94, %s97
      %p106 = scmp.eq.s32.totalorder %s21, 3
      %p107 = por %p105, %p106
      %p108 = scmp.ne.s32.totalorder %s97, %s98
      %p109 = scmp.eq.s32.totalorder %s21, 0
      %p110 = por %p108, %p109
      %p111 = scmp.ne.s32.totalorder %s97, %s98
      %p112 = scmp.eq.s32.totalorder %s22, 3
      %p113 = por %p111, %p112
      %p115 = scmp.ne.s32.totalorder %s98, %s114
      %p116 = scmp.eq.s32.totalorder %s22, 0
      %p117 = por %p115, %p116
      %p118 = scmp.le.s32.totalorder 1, %s16
      %p119 = scmp.lt.s32.totalorder %s16, 5
      %p120 = pnand %p118, %p119
      %p121 = pneg %p120
      // Predicated region
      $region9: #{tpu_custom_call.1} parent=5 // pred_check
        _
      $region10: #{tpu_custom_call.1} parent=5 // pred_check_branch
        %123 = sbr.rel (%p120) target = $region12
      $region11: #{tpu_custom_call.1} parent=5 // pred_region
        %s124 = ssub.s32 %s16, 1
        // Predicated region
        $region13: #{tpu_custom_call.1} parent=11 // pred_check
          %p125 = pneg %p63
        $region14: #{tpu_custom_call.1} parent=11 // pred_check_branch
          %127 = sbr.rel (%p125) target = $region16
        $region15: #{tpu_custom_call.1} parent=11 // pred_region
          %s129 = ssub.s32 1024, 1024
          %130 = vsyncadd [#allocation6], %s129
          %s131 = sshll.u32 [#allocation5], 4
          %s132 = int_to_ptr.vmem [resolvable:$true] %s131
          %137 = dma.hbm_to_vmem [thread:$0]  %s1, 1024, %s132, [#allocation6], 64, 64, 4
        $region16: #{tpu_custom_call.1} parent=11 // pred_fallthru
          _
        // Predicated region
        $region17: #{tpu_custom_call.1} parent=11 // pred_check
          %p138 = pneg %p84
        $region18: #{tpu_custom_call.1} parent=11 // pred_check_branch
          %140 = sbr.rel (%p138) target = $region20
        $region19: #{tpu_custom_call.1} parent=11 // pred_region
          _
        $region20: #{tpu_custom_call.1} parent=11 // pred_fallthru
          _
      $region12: #{tpu_custom_call.1} parent=5 // pred_fallthru
        _
      %p141 = scmp.lt.s32.totalorder %s16, 4
      // Predicated region
      $region21: #{tpu_custom_call.1} parent=5 // pred_check
        %p142 = pneg %p141
      $region22: #{tpu_custom_call.1} parent=5 // pred_check_branch
        %144 = sbr.rel (%p142) target = $region24
      $region23: #{tpu_custom_call.1} parent=5 // pred_region
        // Predicated region
        $region25: #{tpu_custom_call.1} parent=23 // pred_check
          %p145 = pneg %p36
        $region26: #{tpu_custom_call.1} parent=23 // pred_check_branch
          %147 = sbr.rel (%p145) target = $region28
        $region27: #{tpu_custom_call.1} parent=23 // pred_region
          %s148 = sand.u32 %s26, 1
          %s149 = scalar_lea.sflag [#allocation3], %s148
          %s150 = sand.u32 %s26, 1
          %s151 = smul.addr %s150, 64
          %s152 = scalar_lea.vmem [#allocation2], %s151
          %s153 = smul.u32 8, %s16
          %s154 = ssub.s32 25, %s153
          %p155 = scmp.lt.s32.totalorder %s154, 8
          %s156 = scalar_select %p155, %s154, 8
          %s157 = smul.u32 128, %s156
          %s159 = ssub.s32 1024, %s157
          %160 = vsyncadd %s149, %s159
          %p161 = scmp.ne.s32.totalorder 0, %s157
          %s162 = smul.addr %s153, 128
          %s163 = scalar_lea.hbm %s0, %s162
          %s164 = smul.u32 8, %s156
          %s165 = sshll.u32 %s152, 4
          %s166 = int_to_ptr.vmem [resolvable:$true] %s165
          %s167 = sshll.u32 %s164, 4
          %171 = dma.hbm_to_vmem [thread:$0]  (%p161), %s163, %s167, %s166, %s149, 128, 128, 8
        $region28: #{tpu_custom_call.1} parent=23 // pred_fallthru
          _
      $region24: #{tpu_custom_call.1} parent=5 // pred_fallthru
        _
      %p172 = scmp.le.s32.totalorder 1, %s16
      %p173 = scmp.lt.s32.totalorder %s16, 5
      %p174 = pnand %p172, %p173
      %p175 = pneg %p174
      // Predicated region
      $region29: #{tpu_custom_call.1} parent=5 // pred_check
        _
      $region30: #{tpu_custom_call.1} parent=5 // pred_check_branch
        %177 = sbr.rel (%p174) target = $region32
      $region31: #{tpu_custom_call.1} parent=5 // pred_region
        %s178 = ssub.s32 %s16, 1
        %s179 = sand.u32 %s29, 1
        %s180 = scalar_lea.sflag [#allocation3], %s179
        %s181 = sand.u32 %s29, 1
        %s182 = smul.addr %s181, 64
        %s183 = scalar_lea.vmem [#allocation2], %s182
        // Predicated region
        $region33: #{tpu_custom_call.1} parent=31 // pred_check
          %p184 = pneg %p42
        $region34: #{tpu_custom_call.1} parent=31 // pred_check_branch
          %186 = sbr.rel (%p184) target = $region36
        $region35: #{tpu_custom_call.1} parent=31 // pred_region
          %187 = dma.done %s180, 1024
        $region36: #{tpu_custom_call.1} parent=31 // pred_fallthru
          _
        // Predicated region
        $region37: #{tpu_custom_call.1} parent=31 // pred_check
          %p188 = pneg %p63
        $region38: #{tpu_custom_call.1} parent=31 // pred_check_branch
          %190 = sbr.rel (%p188) target = $region40
        $region39: #{tpu_custom_call.1} parent=31 // pred_region
          %191 = dma.done [#allocation6], 1024
        $region40: #{tpu_custom_call.1} parent=31 // pred_fallthru
          _
        %s192 = sand.u32 %s29, 1
        %s193 = scalar_lea.sflag [#allocation3], %s192
        %s194 = sand.u32 %s29, 1
        %s195 = smul.addr %s194, 64
        %s196 = scalar_lea.vmem [#allocation2], %s195
        %p197 = pneg %p42
        %p198 = pneg %p39
        %p199 = pneg %p63
        %p200 = pneg %p60
        %p201 = pneg %p84
        %p202 = pneg %p81
        %p203 = pneg %p110
        %p204 = pneg %p107
        %s205 = sand.u32 %s97, 1
        %s206 = scalar_lea.sflag [#allocation4], %s205
        %s207 = sand.u32 %s97, 1
        %s208 = smul.addr %s207, 32
        %s209 = scalar_lea.vmem [#allocation7], %s208
        %s210 = smul.u32 8, %s21
        %s211 = ssub.s32 25, %s210
        %p212 = scmp.lt.s32.totalorder %s211, 8
        %s213 = scalar_select %p212, %s211, 8
        %s214 = smul.u32 128, %s213
        %s215 = smul.u32 8, %s21
        %s216 = ssub.s32 25, %s215
        %p217 = scmp.lt.s32.totalorder %s216, 8
        %s218 = scalar_select %p217, %s216, 8
        %s219 = smul.u32 64, %s218
        %v221 = vld [vmem:[%s183] sm:$0xff]
        %v222 = vld [vmem:[%s183 + $0x8] sm:$0xff]
        %v223 = vld [vmem:[%s183 + $0x10] sm:$0xff]
        %v224 = vld [vmem:[%s183 + $0x18] sm:$0xff]
        %v225 = vld [vmem:[%s183 + $0x20] sm:$0xff]
        %v226 = vld [vmem:[%s183 + $0x28] sm:$0xff]
        %v227 = vld [vmem:[%s183 + $0x30] sm:$0xff]
        %v228 = vld [vmem:[%s183 + $0x38] sm:$0xff]
        %v229 = vpack.c.bf16 %v222, %v221
        %v230 = vpack.c.bf16 %v224, %v223
        %v231 = vpack.c.bf16 %v226, %v225
        %v232 = vpack.c.bf16 %v228, %v227
        %v233 = vld [vmem:[#allocation5] sm:$0xf]
        %v234 = vld [vmem:[#allocation5 + $0x4] sm:$0xf]
        %v235 = vld [vmem:[#allocation5 + $0x8] sm:$0xf]
        %v236 = vld [vmem:[#allocation5 + $0xc] sm:$0xf]
        %v237 = vld [vmem:[#allocation5 + $0x10] sm:$0xf]
        %v238 = vld [vmem:[#allocation5 + $0x14] sm:$0xf]
        %v239 = vld [vmem:[#allocation5 + $0x18] sm:$0xf]
        %v240 = vld [vmem:[#allocation5 + $0x1c] sm:$0xf]
        %v241 = vld [vmem:[#allocation5 + $0x20] sm:$0xf]
        %v242 = vld [vmem:[#allocation5 + $0x24] sm:$0xf]
        %v243 = vld [vmem:[#allocation5 + $0x28] sm:$0xf]
        %v244 = vld [vmem:[#allocation5 + $0x2c] sm:$0xf]
        %v245 = vld [vmem:[#allocation5 + $0x30] sm:$0xf]
        %v246 = vld [vmem:[#allocation5 + $0x34] sm:$0xf]
        %v247 = vld [vmem:[#allocation5 + $0x38] sm:$0xf]
        %v248 = vld [vmem:[#allocation5 + $0x3c] sm:$0xf]
        %v249 = vld [vmem:[%s2] sm:$0x1]
        %v251 = vlaneseq
        %v252 = vshrl.u32 %v251, 7
        %v253 = vsub.s32 0, %v252
        %v254 = vrot.slane %v249, %v253
        %v272 = vunpack.c.l.b16 %v233
        %v273 = vunpack.c.l.b16 %v234
        %v274 = vunpack.c.l.b16 %v235
        %v275 = vunpack.c.l.b16 %v236
        %v276 = vunpack.c.l.b16 %v237
        %v277 = vunpack.c.l.b16 %v238
        %v278 = vunpack.c.l.b16 %v239
        %v279 = vunpack.c.l.b16 %v240
        %v280 = vunpack.c.l.b16 %v241
        %v281 = vunpack.c.l.b16 %v242
        %v282 = vunpack.c.l.b16 %v243
        %v283 = vunpack.c.l.b16 %v244
        %v284 = vunpack.c.l.b16 %v245
        %v285 = vunpack.c.l.b16 %v246
        %v286 = vunpack.c.l.b16 %v247
        %v287 = vunpack.c.l.b16 %v248
        %v288 = vpack.c.b16 %v273, %v272
        %v289 = vpack.c.b16 %v275, %v274
        %v290 = vpack.c.b16 %v277, %v276
        %v291 = vpack.c.b16 %v279, %v278
        %v292 = vpack.c.b16 %v281, %v280
        %v293 = vpack.c.b16 %v283, %v282
        %v294 = vpack.c.b16 %v285, %v284
        %v295 = vpack.c.b16 %v287, %v286
        %304 = vmatprep.subr.bf16.mxu0 0
        %305 = vmatpush1.bf16.msra.mxu0 %v288
        %306 = vmatprep.subr.bf16.mxu0 0
        %307 = vmatpush1.bf16.msra.mxu0 %v289
        %308 = vmatprep.subr.bf16.mxu0 0
        %309 = vmatpush1.bf16.msra.mxu0 %v290
        %310 = vmatprep.subr.bf16.mxu0 0
        %311 = vmatpush1.bf16.msra.mxu0 %v291
        %312 = vmatprep.subr.bf16.mxu0 0
        %313 = vmatpush1.bf16.msra.mxu0 %v292
        %314 = vmatprep.subr.bf16.mxu0 0
        %315 = vmatpush1.bf16.msra.mxu0 %v293
        %316 = vmatprep.subr.bf16.mxu0 0
        %317 = vmatpush1.bf16.msra.mxu0 %v294
        %318 = vmatprep.subr.bf16.mxu0 0
        %319 = vmatpush1.bf16.msra.mxu0 %v295
        %320 = vmatprep.subr.bf16.mxu0 0
        %321 = vmatpush1.bf16.msra.mxu0 0
        %322 = vmatprep.subr.bf16.mxu0 0
        %323 = vmatpush1.bf16.msra.mxu0 0
        %324 = vmatprep.subr.bf16.mxu0 0
        %325 = vmatpush1.bf16.msra.mxu0 0
        %326 = vmatprep.subr.bf16.mxu0 0
        %327 = vmatpush1.bf16.msra.mxu0 0
        %328 = vmatprep.subr.bf16.mxu0 0
        %329 = vmatpush1.bf16.msra.mxu0 0
        %330 = vmatprep.subr.bf16.mxu0 0
        %331 = vmatpush1.bf16.msra.mxu0 0
        %332 = vmatprep.subr.bf16.mxu0 0
        %333 = vmatpush1.bf16.msra.mxu0 0
        %334 = vmatprep.subr.bf16.mxu0 0
        %335 = vmatpush1.bf16.msra.mxu0 0
        %336 = vmatprep.mubr.bf16.mxu0 0
        %337 = vmatmul.mubr.bf16.gmra.mrb[0].mxu0 %v229
        %v338 = vpop.f32.mrb[0].mxu0
        %v339 = vadd.f32 %v254, %v338
        %v340 = vpop.f32.mrb[0].mxu0
        %v341 = vpop.f32.mrb[0].mxu0
        %v342 = vadd.f32 %v254, %v341
        %v343 = vpop.f32.mrb[0].mxu0
        %344 = vmatprep.mubr.bf16.mxu0 0
        %345 = vmatmul.mubr.bf16.gmra.mrb[0].mxu0 %v230
        %v346 = vpop.f32.mrb[0].mxu0
        %v347 = vadd.f32 %v254, %v346
        %v348 = vpop.f32.mrb[0].mxu0
        %v349 = vpop.f32.mrb[0].mxu0
        %v350 = vadd.f32 %v254, %v349
        %v351 = vpop.f32.mrb[0].mxu0
        %352 = vmatprep.mubr.bf16.mxu0 0
        %353 = vmatmul.mubr.bf16.gmra.mrb[0].mxu0 %v231
        %v354 = vpop.f32.mrb[0].mxu0
        %v355 = vadd.f32 %v254, %v354
        %v356 = vpop.f32.mrb[0].mxu0
        %v357 = vpop.f32.mrb[0].mxu0
        %v358 = vadd.f32 %v254, %v357
        %v359 = vpop.f32.mrb[0].mxu0
        %360 = vmatprep.mubr.bf16.mxu0 0
        %361 = vmatmul.mubr.bf16.gmra.mrb[0].mxu0 %v232
        %v362 = vpop.f32.mrb[0].mxu0
        %v363 = vadd.f32 %v254, %v362
        %v364 = vpop.f32.mrb[0].mxu0
        %v365 = vpop.f32.mrb[0].mxu0
        %v366 = vadd.f32 %v254, %v365
        %v367 = vpop.f32.mrb[0].mxu0
        %368 = vdwg.mxu0
        %v369 = vtanh.pop %v339
        %v370 = vtanh.pop %v342
        %v371 = vtanh.pop %v347
        %v372 = vtanh.pop %v350
        %v373 = vtanh.pop %v355
        %v374 = vtanh.pop %v358
        %v375 = vtanh.pop %v363
        %v376 = vtanh.pop %v366
        %v377 = vmul.f32 %v369, 0.5
        %v378 = vmul.f32 %v370, 0.5
        %v379 = vmul.f32 %v371, 0.5
        %v380 = vmul.f32 %v372, 0.5
        %v381 = vmul.f32 %v373, 0.5
        %v382 = vmul.f32 %v374, 0.5
        %v383 = vmul.f32 %v375, 0.5
        %v384 = vmul.f32 %v376, 0.5
        %v385 = vadd.f32 %v377, 0.5
        %v386 = vadd.f32 %v378, 0.5
        %v387 = vadd.f32 %v379, 0.5
        %v388 = vadd.f32 %v380, 0.5
        %v389 = vadd.f32 %v381, 0.5
        %v390 = vadd.f32 %v382, 0.5
        %v391 = vadd.f32 %v383, 0.5
        %v392 = vadd.f32 %v384, 0.5
        %v393 = vpack.c.bf16 %v386, %v385
        %v394 = vpack.c.bf16 %v388, %v387
        %v395 = vpack.c.bf16 %v390, %v389
        %v396 = vpack.c.bf16 %v392, %v391
        %v401 = vunpack.c.l.b16 %v393
        %v402 = vunpack.c.h.b16 %v393
        %v403 = vunpack.c.l.b16 %v394
        %v404 = vunpack.c.h.b16 %v394
        %v405 = vunpack.c.l.b16 %v395
        %v406 = vunpack.c.h.b16 %v395
        %v407 = vunpack.c.l.b16 %v396
        %v408 = vunpack.c.h.b16 %v396
        %v409 = vpack.c.b16 %v401, %v401
        %v410 = vpack.c.b16 %v402, %v402
        %v411 = vpack.c.b16 %v403, %v403
        %v412 = vpack.c.b16 %v404, %v404
        %v413 = vpack.c.b16 %v405, %v405
        %v414 = vpack.c.b16 %v406, %v406
        %v415 = vpack.c.b16 %v407, %v407
        %v416 = vpack.c.b16 %v408, %v408
        %425 = vst [vmem:[%s209] sm:$0xf] %v409
        %426 = vst [vmem:[%s209 + $0x4] sm:$0xf] %v410
        %427 = vst [vmem:[%s209 + $0x8] sm:$0xf] %v411
        %428 = vst [vmem:[%s209 + $0xc] sm:$0xf] %v412
        %429 = vst [vmem:[%s209 + $0x10] sm:$0xf] %v413
        %430 = vst [vmem:[%s209 + $0x14] sm:$0xf] %v414
        %431 = vst [vmem:[%s209 + $0x18] sm:$0xf] %v415
        %432 = vst [vmem:[%s209 + $0x1c] sm:$0xf] %v416
        %s433 = sand.u32 %s97, 1
        %s434 = scalar_lea.sflag [#allocation4], %s433
        %s435 = sand.u32 %s97, 1
        %s436 = smul.addr %s435, 32
        %s437 = scalar_lea.vmem [#allocation7], %s436
        // Predicated region
        $region41: #{tpu_custom_call.1} parent=31 // pred_check
          %p438 = pneg %p107
        $region42: #{tpu_custom_call.1} parent=31 // pred_check_branch
          %440 = sbr.rel (%p438) target = $region44
        $region43: #{tpu_custom_call.1} parent=31 // pred_region
          %s441 = smul.u32 8, %s21
          %s442 = ssub.s32 25, %s441
          %p443 = scmp.lt.s32.totalorder %s442, 8
          %s444 = scalar_select %p443, %s442, 8
          %s445 = smul.u32 64, %s444
          %s447 = ssub.s32 512, %s445
          %448 = vsyncadd %s434, %s447
          %p449 = scmp.ne.s32.totalorder 0, %s445
          %s450 = smul.addr %s441, 64
          %s451 = scalar_lea.hbm %s3, %s450
          %s452 = smul.u32 4, %s444
          %s453 = sshll.u32 %s437, 4
          %s454 = int_to_ptr.vmem [resolvable:$true] %s453
          %s455 = sshll.u32 %s452, 4
          %459 = dma.vmem_to_hbm [thread:$0]  (%p449), %s454, %s455, %s451, %s434, 64, 64, 4
        $region44: #{tpu_custom_call.1} parent=31 // pred_fallthru
          _
      $region32: #{tpu_custom_call.1} parent=5 // pred_fallthru
        _
      %p460 = scmp.le.s32.totalorder 2, %s16
      // Predicated region
      $region45: #{tpu_custom_call.1} parent=5 // pred_check
        %p461 = pneg %p460
      $region46: #{tpu_custom_call.1} parent=5 // pred_check_branch
        %463 = sbr.rel (%p461) target = $region48
      $region47: #{tpu_custom_call.1} parent=5 // pred_region
        %s464 = ssub.s32 %s16, 2
        // Predicated region
        $region49: #{tpu_custom_call.1} parent=47 // pred_check
          %p465 = pneg %p113
        $region50: #{tpu_custom_call.1} parent=47 // pred_check_branch
          %467 = sbr.rel (%p465) target = $region52
        $region51: #{tpu_custom_call.1} parent=47 // pred_region
          %s468 = sand.u32 %s98, 1
          %s469 = scalar_lea.sflag [#allocation4], %s468
          %s470 = sand.u32 %s98, 1
          %s471 = smul.addr %s470, 32
          %s472 = scalar_lea.vmem [#allocation7], %s471
          %473 = dma.done %s469, 512
        $region52: #{tpu_custom_call.1} parent=47 // pred_fallthru
          _
      $region48: #{tpu_custom_call.1} parent=5 // pred_fallthru
        _
    $region6: #{tpu_custom_call.1} parent=1 // loop_footer
      %s20 = sadd.s32 1, %s16
    $region7: #{tpu_custom_call.1} parent=1 // loop_footer_branch
      %15 = sbr.rel target = $region3
    $region8: #{tpu_custom_call.1} parent=1 // loop_exit
      _
    %474 = vsyncpa [#allocation3], 1
    %s475 = scalar_lea.sflag [#allocation3], 1
    %476 = vsyncpa %s475, 1
    %477 = vsyncpa [#allocation6], 1
    %478 = vsyncpa [#allocation4], 1
    %s479 = scalar_lea.sflag [#allocation4], 1
    %480 = vsyncpa %s479, 1

</llo_original>
